<compile_context>
chip_gen: v6e
topology: v6e:2x2x1
jax: 0.10.0
libtpu: 0.0.40
codegen_flags: <defaults>
</compile_context>

<pallas_src>
import jax
import jax.numpy as jnp
from jax.experimental import pallas as pl
from jax.experimental.pallas import tpu as pltpu


def _round_up(v, m):
    return (v + m - 1) // m * m


def _mlp_kernel(x_ref, w1_ref, b1_ref, w2_ref, b2_ref, o_ref):
    # x_ref:  (TB, Dx)   raw input rows (preference already folded into the bias)
    # w1_ref: (Dx, Hp)   fc1 weight rows for the x features, zero-padded to Hp
    # b1_ref: (1,  Hp)   effective fc1 bias: pref @ W1_pref + b1, zero-padded
    # w2_ref: (Hp, O)    fc2 weight (padded rows are zero)
    # b2_ref: (1,  O)    fc2 bias
    # o_ref:  (TB, O)
    #
    # For large H/O on v5e/v6e, cast the dot operands to bf16 (keep
    # preferred_element_type=f32 and the bias/ReLU in f32).  Irrelevant at H=10.
    h = jnp.dot(x_ref[...], w1_ref[...], preferred_element_type=jnp.float32)
    h = jnp.maximum(h + b1_ref[...], 0.0)  # ReLU (VPU, f32)
    y = jnp.dot(h, w2_ref[...], preferred_element_type=jnp.float32)
    o_ref[...] = (y + b2_ref[...]).astype(o_ref.dtype)


def prepare_params(w1, b1, w2, b2, input_dim):
    """One-time parameter packing/padding (hoisted out of the per-call path).

    w1: (input_dim + preference_dim, hidden_dim)  [transposed vs. PyTorch]
    b1: (hidden_dim,)
    w2: (hidden_dim, output_dim)
    b2: (output_dim,)
    """
    w1 = jnp.asarray(w1, jnp.float32)
    b1 = jnp.asarray(b1, jnp.float32)
    w2 = jnp.asarray(w2, jnp.float32)
    b2 = jnp.asarray(b2, jnp.float32)

    H = w1.shape[1]
    O = w2.shape[1]
    Hp = _round_up(H, 128)

    w1_x = w1[:input_dim, :]      # rows that multiply x
    w1_pref = w1[input_dim:, :]   # rows that multiply the preference vector

    w1_x_p = jnp.zeros((input_dim, Hp), jnp.float32).at[:, :H].set(w1_x)
    w2_p = jnp.zeros((Hp, O), jnp.float32).at[:H, :].set(w2)
    b2_p = b2.reshape(1, O)

    return w1_x_p, w1_pref, b1, w2_p, b2_p


@jax.jit
def preference_target_network_forward(x, preference, w1_x_p, w1_pref, b1, w2_p, b2_p):
    """x: (B, input_dim), preference: (preference_dim,) or (1, preference_dim).
    Returns (B, output_dim) float32, matching relu(fc1(cat(x, pref))) @ fc2.
    """
    x = x.astype(jnp.float32)
    preference = jnp.reshape(preference, (1, -1)).astype(jnp.float32)

    B, input_dim = x.shape
    H = b1.shape[0]
    Hp = w1_x_p.shape[1]
    O = w2_p.shape[1]

    # Fold the per-call-constant preference into the fc1 bias (tiny GEMV in JAX).
    b1_eff = preference @ w1_pref + b1[None, :]                      # (1, H)
    b1_eff_p = jnp.zeros((1, Hp), jnp.float32).at[:, :H].set(b1_eff)  # (1, Hp)

    # Batch tiling: big tiles for DMA amortization, bounded VMEM independent of B.
    TB = min(512, _round_up(B, 8))
    Bp = _round_up(B, TB)
    if Bp != B:
        x_p = jnp.zeros((Bp, input_dim), jnp.float32).at[:B, :].set(x)
    else:
        x_p = x
    grid = (Bp // TB,)

    # Explicit scoped-VMEM budget: 2x (double-buffered) x/out tiles + 2x params
    # + the (TB, Hp) hidden intermediate, with 2x headroom; clamped to stay well
    # inside every generation's physical VMEM (v7x has only 64 MiB).
    est_bytes = 4 * (
        2 * TB * input_dim          # x tiles (double-buffered)
        + 2 * TB * O                # out tiles
        + 2 * (input_dim * Hp + Hp + Hp * O + O)  # weights/biases
        + TB * Hp                   # hidden activations
    )
    vmem_limit = int(min(max(2 * est_bytes, 8 << 20), 48 << 20))

    # NOTE: if VMEM gets tight when scaling H/O up (esp. v7x), add
    # pipeline_mode=pl.Buffered(1) to the constant-index weight/bias specs.
    out = pl.pallas_call(
        _mlp_kernel,
        out_shape=jax.ShapeDtypeStruct((Bp, O), jnp.float32),
        grid=grid,
        in_specs=[
            pl.BlockSpec((TB, input_dim), lambda i: (i, 0)),   # x rows
            pl.BlockSpec((input_dim, Hp), lambda i: (0, 0)),   # fc1 weight (x part)
            pl.BlockSpec((1, Hp), lambda i: (0, 0)),           # effective fc1 bias
            pl.BlockSpec((Hp, O), lambda i: (0, 0)),           # fc2 weight
            pl.BlockSpec((1, O), lambda i: (0, 0)),            # fc2 bias
        ],
        out_specs=pl.BlockSpec((TB, O), lambda i: (i, 0)),
        compiler_params=pltpu.CompilerParams(
            dimension_semantics=("parallel",),   # batch tiles are independent (2 TCs on v7x)
            vmem_limit_bytes=vmem_limit,
        ),
    )(x_p, w1_x_p, b1_eff_p, w2_p, b2_p)

    return out[:B, :]


def init_params(key, input_dim=1, preference_dim=2, hidden_dim=10, output_dim=1):
    """Deterministic init mirroring nn.Linear shapes (weights kept transposed)."""
    k1, k2, k3, k4 = jax.random.split(key, 4)
    fan_in1 = input_dim + preference_dim
    fan_in2 = hidden_dim
    bound1 = 1.0 / jnp.sqrt(fan_in1)
    bound2 = 1.0 / jnp.sqrt(fan_in2)
    w1 = jax.random.uniform(k1, (fan_in1, hidden_dim), jnp.float32, -bound1, bound1)
    b1 = jax.random.uniform(k2, (hidden_dim,), jnp.float32, -bound1, bound1)
    w2 = jax.random.uniform(k3, (hidden_dim, output_dim), jnp.float32, -bound2, bound2)
    b2 = jax.random.uniform(k4, (output_dim,), jnp.float32, -bound2, bound2)
    return w1, b1, w2, b2


def _reference(x, preference, w1, b1, w2, b2):
    B = x.shape[0]
    pref_dim = preference.shape[-1]
    combined = jnp.concatenate(
        [x, jnp.broadcast_to(jnp.reshape(preference, (1, -1)), (B, pref_dim))], axis=1
    )
    return jnp.maximum(combined @ w1 + b1, 0.0) @ w2 + b2


if __name__ == "__main__":
    key = jax.random.PRNGKey(0)
    k_param, k_x, k_pref, k_x2 = jax.random.split(key, 4)

    input_dim, preference_dim, hidden_dim, output_dim = 1, 2, 10, 1

    w1, b1, w2, b2 = init_params(
        k_param, input_dim, preference_dim, hidden_dim, output_dim
    )
    # One-time packing/padding (hoisted out of the forward path).
    params = prepare_params(w1, b1, w2, b2, input_dim)

    preference = jax.random.uniform(k_pref, (preference_dim,), jnp.float32)

    # Small default case (single grid step).
    B = 8
    x = jax.random.normal(k_x, (B, input_dim), jnp.float32)
    out = preference_target_network_forward(x, preference, *params)
    out = jax.block_until_ready(out)
    ref = _reference(x, preference, w1, b1, w2, b2)
    assert out.shape == (B, output_dim)
    assert jnp.allclose(out, ref, atol=1e-5, rtol=1e-5), (out, ref)

    # Larger ragged batch: exercises multi-tile grid + padded-row masking.
    B2 = 1000
    x2 = jax.random.normal(k_x2, (B2, input_dim), jnp.float32)
    out2 = preference_target_network_forward(x2, preference, *params)
    out2 = jax.block_until_ready(out2)
    ref2 = _reference(x2, preference, w1, b1, w2, b2)
    assert out2.shape == (B2, output_dim)
    assert jnp.allclose(out2, ref2, atol=1e-5, rtol=1e-5)

    print("KERNEL_OK")
</pallas_src>

<mosaic_0001>
module attributes {stable_mosaic.version = 11 : i64} {
  func.func @_mlp_kernel(%arg0: i32, %arg1: memref<8x1xf32, #tpu.memory_space<vmem>>, %arg2: memref<1x128xf32, #tpu.memory_space<vmem>>, %arg3: memref<1x128xf32, #tpu.memory_space<vmem>>, %arg4: memref<128x1xf32, #tpu.memory_space<vmem>>, %arg5: memref<1x1xf32, #tpu.memory_space<vmem>>, %arg6: memref<8x1xf32, #tpu.memory_space<vmem>>) attributes {dimension_semantics = [#tpu.dimension_semantics<parallel>], iteration_bounds = array<i64: 1>, scalar_prefetch = 0 : i64, scratch_operands = 0 : i64, tpu.core_type = #tpu.core_type<tc>, window_params = [{transform_indices = @transform_0, window_bounds = array<i64: 8, 1>}, {pipeline_mode = #tpu.pipeline_mode<synchronous>, transform_indices = @transform_1, window_bounds = array<i64: 1, 128>}, {pipeline_mode = #tpu.pipeline_mode<synchronous>, transform_indices = @transform_2, window_bounds = array<i64: 1, 128>}, {pipeline_mode = #tpu.pipeline_mode<synchronous>, transform_indices = @transform_3, window_bounds = array<i64: 128, 1>}, {pipeline_mode = #tpu.pipeline_mode<synchronous>, transform_indices = @transform_4, window_bounds = array<i64: 1, 1>}, {transform_indices = @transform_5, window_bounds = array<i64: 8, 1>}]} {
    %c0 = arith.constant 0 : index
    %c0_0 = arith.constant 0 : index
    %0 = vector.load %arg1[%c0, %c0_0] : memref<8x1xf32, #tpu.memory_space<vmem>>, vector<8x1xf32>
    %c0_1 = arith.constant 0 : index
    %c0_2 = arith.constant 0 : index
    %1 = vector.load %arg2[%c0_1, %c0_2] : memref<1x128xf32, #tpu.memory_space<vmem>>, vector<1x128xf32>
    %cst = arith.constant dense<0.000000e+00> : vector<8x128xf32>
    %2 = tpu.matmul %0, %1, %cst {dimension_numbers = #tpu.dot_dimension_numbers<[1], [0], [0], [1], [0, 0, 1, 1], [], []>} : vector<8x1xf32>, vector<1x128xf32>, vector<8x128xf32> -> vector<8x128xf32>
    %c0_3 = arith.constant 0 : index
    %c0_4 = arith.constant 0 : index
    %3 = vector.load %arg3[%c0_3, %c0_4] : memref<1x128xf32, #tpu.memory_space<vmem>>, vector<1x128xf32>
    %4 = vector.broadcast %3 : vector<1x128xf32> to vector<8x128xf32>
    %5 = arith.addf %2, %4 : vector<8x128xf32>
    %cst_5 = arith.constant 0.000000e+00 : f32
    %6 = vector.broadcast %cst_5 : f32 to vector<8x128xf32>
    %7 = arith.maximumf %5, %6 : vector<8x128xf32>
    %c0_6 = arith.constant 0 : index
    %c0_7 = arith.constant 0 : index
    %8 = vector.load %arg4[%c0_6, %c0_7] : memref<128x1xf32, #tpu.memory_space<vmem>>, vector<128x1xf32>
    %cst_8 = arith.constant dense<0.000000e+00> : vector<8x1xf32>
    %9 = tpu.matmul %7, %8, %cst_8 {dimension_numbers = #tpu.dot_dimension_numbers<[1], [0], [0], [1], [0, 0, 1, 1], [], []>} : vector<8x128xf32>, vector<128x1xf32>, vector<8x1xf32> -> vector<8x1xf32>
    %c0_9 = arith.constant 0 : index
    %c0_10 = arith.constant 0 : index
    %10 = vector.load %arg5[%c0_9, %c0_10] : memref<1x1xf32, #tpu.memory_space<vmem>>, vector<1x1xf32>
    %11 = vector.broadcast %10 : vector<1x1xf32> to vector<8x1xf32>
    %12 = arith.addf %9, %11 : vector<8x1xf32>
    %c0_11 = arith.constant 0 : index
    %c0_12 = arith.constant 0 : index
    %13 = vector.load %arg6[%c0_11, %c0_12] : memref<8x1xf32, #tpu.memory_space<vmem>>, vector<8x1xf32>
    tpu.vector_store %arg6[%c0_11, %c0_12], %12 {strides = array<i32>} : memref<8x1xf32, #tpu.memory_space<vmem>>, vector<8x1xf32>,
    return
  }
  func.func @transform_0(%arg0: i32) -> (i32, i32) {
    %c0_i32 = arith.constant 0 : i32
    %c0_i32_0 = arith.constant 0 : i32
    return %arg0, %c0_i32 : i32, i32
  }
  func.func @transform_1(%arg0: i32) -> (i32, i32) {
    %c0_i32 = arith.constant 0 : i32
    %c0_i32_0 = arith.constant 0 : i32
    %c0_i32_1 = arith.constant 0 : i32
    return %c0_i32, %c0_i32_0 : i32, i32
  }
  func.func @transform_2(%arg0: i32) -> (i32, i32) {
    %c0_i32 = arith.constant 0 : i32
    %c0_i32_0 = arith.constant 0 : i32
    %c0_i32_1 = arith.constant 0 : i32
    return %c0_i32, %c0_i32_0 : i32, i32
  }
  func.func @transform_3(%arg0: i32) -> (i32, i32) {
    %c0_i32 = arith.constant 0 : i32
    %c0_i32_0 = arith.constant 0 : i32
    %c0_i32_1 = arith.constant 0 : i32
    return %c0_i32, %c0_i32_0 : i32, i32
  }
  func.func @transform_4(%arg0: i32) -> (i32, i32) {
    %c0_i32 = arith.constant 0 : i32
    %c0_i32_0 = arith.constant 0 : i32
    %c0_i32_1 = arith.constant 0 : i32
    return %c0_i32, %c0_i32_0 : i32, i32
  }
  func.func @transform_5(%arg0: i32) -> (i32, i32) {
    %c0_i32 = arith.constant 0 : i32
    %c0_i32_0 = arith.constant 0 : i32
    return %arg0, %c0_i32 : i32, i32
  }
}

</mosaic_0001>

<llo_original>
// kernel: preference_target_network_forward.1
$region0: #{preference_target_network_forward.1}
  #allocation0 [shape = 'u32[]', space=smem, size = 0x4, offset = 0x4, fixed_abs, tag = 'smem constant byte address 0x4 - core index']
  #allocation1 [shape = 'u32[144,128]{1,0:T(1,128)}', space=vmem, size = 0x12000, scoped, tag = 'internal scratch']
  #allocation2 [shape = 'f32[1,1]{1,0:T(1,128)S(1)}', space=vmem, size = 0x200, scoped, tag = 'scoped memory for preference_target_network_forward.1']
  %s0 = inlined_call_operand.vmem [shape: f32[8,1], index: 0, kind: input, shape index: {}]
  %s1 = inlined_call_operand.vmem [shape: f32[1,128], index: 1, kind: input, shape index: {}]
  %s2 = inlined_call_operand.vmem [shape: f32[1,128], index: 2, kind: input, shape index: {}]
  %s3 = inlined_call_operand.vmem [shape: f32[128,1], index: 3, kind: input, shape index: {}]
  %s4 = inlined_call_operand.<no memory space> [shape: f32[1,1], index: 4, kind: input, shape index: {}]
  %s5 = inlined_call_operand.vmem [shape: f32[8,1], index: 5, kind: output, shape index: {}]
  %s6 = sld [smem:[#allocation0]]
  $region30: #{preference_target_network_forward.1} parent=0
    _
  %s8 = ssub.s32 1, %s6
  %s9 = scalar_select 0, %s8, %s6
  %v10 = vstv %s4
  %11 = vst [vmem:[#allocation2] sm:$0x1] %v10
  // Predicated region
  $region2: #{preference_target_network_forward.1} parent=0 // pred_check
    _
  $region3: #{preference_target_network_forward.1} parent=0 // pred_check_branch
    %13 = sbr.rel (0) target = $region5
  $region4: #{preference_target_network_forward.1} parent=0 // pred_region
    _
  $region5: #{preference_target_network_forward.1} parent=0 // pred_fallthru
    _
  // Predicated region
  $region6: #{preference_target_network_forward.1} parent=0 // pred_check
    _
  $region7: #{preference_target_network_forward.1} parent=0 // pred_check_branch
    %15 = sbr.rel (0) target = $region9
  $region8: #{preference_target_network_forward.1} parent=0 // pred_region
    _
  $region9: #{preference_target_network_forward.1} parent=0 // pred_fallthru
    _
  // Predicated region
  $region10: #{preference_target_network_forward.1} parent=0 // pred_check
    _
  $region11: #{preference_target_network_forward.1} parent=0 // pred_check_branch
    %17 = sbr.rel (0) target = $region13
  $region12: #{preference_target_network_forward.1} parent=0 // pred_region
    _
  $region13: #{preference_target_network_forward.1} parent=0 // pred_fallthru
    _
  // Predicated region
  $region14: #{preference_target_network_forward.1} parent=0 // pred_check
    _
  $region15: #{preference_target_network_forward.1} parent=0 // pred_check_branch
    %19 = sbr.rel (0) target = $region17
  $region16: #{preference_target_network_forward.1} parent=0 // pred_region
    _
  $region17: #{preference_target_network_forward.1} parent=0 // pred_fallthru
    _
  // Predicated region
  $region18: #{preference_target_network_forward.1} parent=0 // pred_check
    _
  $region19: #{preference_target_network_forward.1} parent=0 // pred_check_branch
    %21 = sbr.rel (0) target = $region21
  $region20: #{preference_target_network_forward.1} parent=0 // pred_region
    _
  $region21: #{preference_target_network_forward.1} parent=0 // pred_fallthru
    _
  %v22 = vld [vmem:[%s0] sm:$0xff]
  %v23 = vld [vmem:[%s1] sm:$0x1]
  %v24 = vld [vmem:[%s2] sm:$0x1]
  %v26 = vlaneseq
  %v27 = vshrl.u32 %v26, 7
  %v28 = vsub.s32 0, %v27
  %v29 = vrot.slane %v24, %v28
  %vm31 = vcmask 7168
  %v33 = vsel %vm31, %v22, 0
  %vm35 = vcmask 1040384
  %v37 = vsel %vm35, %v23, 0
  %39 = vmatprep.subr.mxu0 0.0
  %40 = vmatpush1.msra.mxu0 0.0
  %41 = vmatprep.subr.mxu0 0.0
  %42 = vmatpush1.msra.mxu0 0.0
  %43 = vmatprep.subr.mxu0 0.0
  %44 = vmatpush1.msra.mxu0 0.0
  %45 = vmatprep.subr.mxu0 0.0
  %46 = vmatpush1.msra.mxu0 0.0
  %47 = vmatprep.subr.mxu0 0.0
  %48 = vmatpush1.msra.mxu0 0.0
  %49 = vmatprep.subr.mxu0 0.0
  %50 = vmatpush1.msra.mxu0 0.0
  %51 = vmatprep.subr.mxu0 0.0
  %52 = vmatpush1.msra.mxu0 0.0
  %53 = vmatprep.subr.mxu0 0.0
  %54 = vmatpush1.msra.mxu0 0.0
  %55 = vmatprep.subr.mxu0 0.0
  %56 = vmatpush1.msra.mxu0 0.0
  %57 = vmatprep.subr.mxu0 0.0
  %58 = vmatpush1.msra.mxu0 0.0
  %59 = vmatprep.subr.mxu0 0.0
  %60 = vmatpush1.msra.mxu0 0.0
  %61 = vmatprep.subr.mxu0 0.0
  %62 = vmatpush1.msra.mxu0 0.0
  %63 = vmatprep.subr.mxu0 0.0
  %64 = vmatpush1.msra.mxu0 0.0
  %65 = vmatprep.subr.mxu0 0.0
  %66 = vmatpush1.msra.mxu0 0.0
  %67 = vmatprep.subr.mxu0 0.0
  %68 = vmatpush1.msra.mxu0 0.0
  %69 = vmatprep.subr.mxu0 0.0
  %70 = vmatpush1.msra.mxu0 %v37
  %71 = vmatprep.subr.mxu0 0.0
  %72 = vmatpush2.msra.mxu0 0.0
  %73 = vmatprep.subr.mxu0 0.0
  %74 = vmatpush2.msra.mxu0 0.0
  %75 = vmatprep.subr.mxu0 0.0
  %76 = vmatpush2.msra.mxu0 0.0
  %77 = vmatprep.subr.mxu0 0.0
  %78 = vmatpush2.msra.mxu0 0.0
  %79 = vmatprep.subr.mxu0 0.0
  %80 = vmatpush2.msra.mxu0 0.0
  %81 = vmatprep.subr.mxu0 0.0
  %82 = vmatpush2.msra.mxu0 0.0
  %83 = vmatprep.subr.mxu0 0.0
  %84 = vmatpush2.msra.mxu0 0.0
  %85 = vmatprep.subr.mxu0 0.0
  %86 = vmatpush2.msra.mxu0 0.0
  %87 = vmatprep.subr.mxu0 0.0
  %88 = vmatpush2.msra.mxu0 0.0
  %89 = vmatprep.subr.mxu0 0.0
  %90 = vmatpush2.msra.mxu0 0.0
  %91 = vmatprep.subr.mxu0 0.0
  %92 = vmatpush2.msra.mxu0 0.0
  %93 = vmatprep.subr.mxu0 0.0
  %94 = vmatpush2.msra.mxu0 0.0
  %95 = vmatprep.subr.mxu0 0.0
  %96 = vmatpush2.msra.mxu0 0.0
  %97 = vmatprep.subr.mxu0 0.0
  %98 = vmatpush2.msra.mxu0 0.0
  %99 = vmatprep.subr.mxu0 0.0
  %100 = vmatpush2.msra.mxu0 0.0
  %101 = vmatprep.subr.mxu0 0.0
  %102 = vmatpush2.msra.mxu0 0.0
  %103 = vmatprep.mubr.f32.mxu0 0.0
  %104 = vmatmul.mubr.f32.gmra.mxu0 %v33
  %v105 = vpop.f32.mrf.mxu0
  %v106 = vadd.f32 %v29, %v105
  %v107 = vpop.f32.mrf.mxu0
  %108 = vdwg.mxu0
  %v109 = vmax.f32 %v106, 0.0
  %v110 = vld [vmem:[%s3] sm:$0xff]
  %v111 = vld [vmem:[%s3 + $0x8] sm:$0xff]
  %v112 = vld [vmem:[%s3 + $0x10] sm:$0xff]
  %v113 = vld [vmem:[%s3 + $0x18] sm:$0xff]
  %v114 = vld [vmem:[%s3 + $0x20] sm:$0xff]
  %v115 = vld [vmem:[%s3 + $0x28] sm:$0xff]
  %v116 = vld [vmem:[%s3 + $0x30] sm:$0xff]
  %v117 = vld [vmem:[%s3 + $0x38] sm:$0xff]
  %v118 = vld [vmem:[%s3 + $0x40] sm:$0xff]
  %v119 = vld [vmem:[%s3 + $0x48] sm:$0xff]
  %v120 = vld [vmem:[%s3 + $0x50] sm:$0xff]
  %v121 = vld [vmem:[%s3 + $0x58] sm:$0xff]
  %v122 = vld [vmem:[%s3 + $0x60] sm:$0xff]
  %v123 = vld [vmem:[%s3 + $0x68] sm:$0xff]
  %v124 = vld [vmem:[%s3 + $0x70] sm:$0xff]
  %v125 = vld [vmem:[%s3 + $0x78] sm:$0xff]
  %v126 = vld [vmem:[#allocation2] sm:$0x1]
  %v128 = vlaneseq
  %v129 = vshrl.u32 %v128, 7
  %v130 = vsub.s32 0, %v129
  %v131 = vrot.slane %v126, %v130
  %133 = vmatprep.subr.mxu0 0.0
  %134 = vmatpush1.msra.mxu0 %v125
  %135 = vmatprep.subr.mxu0 0.0
  %136 = vmatpush1.msra.mxu0 %v124
  %137 = vmatprep.subr.mxu0 0.0
  %138 = vmatpush1.msra.mxu0 %v123
  %139 = vmatprep.subr.mxu0 0.0
  %140 = vmatpush1.msra.mxu0 %v122
  %141 = vmatprep.subr.mxu0 0.0
  %142 = vmatpush1.msra.mxu0 %v121
  %143 = vmatprep.subr.mxu0 0.0
  %144 = vmatpush1.msra.mxu0 %v120
  %145 = vmatprep.subr.mxu0 0.0
  %146 = vmatpush1.msra.mxu0 %v119
  %147 = vmatprep.subr.mxu0 0.0
  %148 = vmatpush1.msra.mxu0 %v118
  %149 = vmatprep.subr.mxu0 0.0
  %150 = vmatpush1.msra.mxu0 %v117
  %151 = vmatprep.subr.mxu0 0.0
  %152 = vmatpush1.msra.mxu0 %v116
  %153 = vmatprep.subr.mxu0 0.0
  %154 = vmatpush1.msra.mxu0 %v115
  %155 = vmatprep.subr.mxu0 0.0
  %156 = vmatpush1.msra.mxu0 %v114
  %157 = vmatprep.subr.mxu0 0.0
  %158 = vmatpush1.msra.mxu0 %v113
  %159 = vmatprep.subr.mxu0 0.0
  %160 = vmatpush1.msra.mxu0 %v112
  %161 = vmatprep.subr.mxu0 0.0
  %162 = vmatpush1.msra.mxu0 %v111
  %163 = vmatprep.subr.mxu0 0.0
  %164 = vmatpush1.msra.mxu0 %v110
  %165 = vmatprep.subr.mxu0 0.0
  %166 = vmatpush2.msra.mxu0 0.0
  %167 = vmatprep.subr.mxu0 0.0
  %168 = vmatpush2.msra.mxu0 0.0
  %169 = vmatprep.subr.mxu0 0.0
  %170 = vmatpush2.msra.mxu0 0.0
  %171 = vmatprep.subr.mxu0 0.0
  %172 = vmatpush2.msra.mxu0 0.0
  %173 = vmatprep.subr.mxu0 0.0
  %174 = vmatpush2.msra.mxu0 0.0
  %175 = vmatprep.subr.mxu0 0.0
  %176 = vmatpush2.msra.mxu0 0.0
  %177 = vmatprep.subr.mxu0 0.0
  %178 = vmatpush2.msra.mxu0 0.0
  %179 = vmatprep.subr.mxu0 0.0
  %180 = vmatpush2.msra.mxu0 0.0
  %181 = vmatprep.subr.mxu0 0.0
  %182 = vmatpush2.msra.mxu0 0.0
  %183 = vmatprep.subr.mxu0 0.0
  %184 = vmatpush2.msra.mxu0 0.0
  %185 = vmatprep.subr.mxu0 0.0
  %186 = vmatpush2.msra.mxu0 0.0
  %187 = vmatprep.subr.mxu0 0.0
  %188 = vmatpush2.msra.mxu0 0.0
  %189 = vmatprep.subr.mxu0 0.0
  %190 = vmatpush2.msra.mxu0 0.0
  %191 = vmatprep.subr.mxu0 0.0
  %192 = vmatpush2.msra.mxu0 0.0
  %193 = vmatprep.subr.mxu0 0.0
  %194 = vmatpush2.msra.mxu0 0.0
  %195 = vmatprep.subr.mxu0 0.0
  %196 = vmatpush2.msra.mxu0 0.0
  %197 = vmatprep.mubr.f32.mxu0 0.0
  %198 = vmatmul.mubr.f32.gmra.mxu0 %v109
  %v199 = vpop.f32.mrf.mxu0
  %v200 = vadd.f32 %v131, %v199
  %v201 = vpop.f32.mrf.mxu0
  %202 = vdwg.mxu0
  %203 = vst.msk [vmem:[%s5] sm:$0xff] %vm31, %v200
  // Predicated region
  $region22: #{preference_target_network_forward.1} parent=0 // pred_check
    _
  $region23: #{preference_target_network_forward.1} parent=0 // pred_check_branch
    %205 = sbr.rel (0) target = $region25
  $region24: #{preference_target_network_forward.1} parent=0 // pred_region
    _
  $region25: #{preference_target_network_forward.1} parent=0 // pred_fallthru
    _
  // Predicated region
  $region26: #{preference_target_network_forward.1} parent=0 // pred_check
    _
  $region27: #{preference_target_network_forward.1} parent=0 // pred_check_branch
    %207 = sbr.rel (0) target = $region29
  $region28: #{preference_target_network_forward.1} parent=0 // pred_region
    _
  $region29: #{preference_target_network_forward.1} parent=0 // pred_fallthru
    _

</llo_original>
